<compile_context>
chip_gen: v7x
topology: tpu7x:2x2x1
jax: 0.10.0
libtpu: 0.0.40
codegen_flags: <defaults>
</compile_context>

<pallas_src>
import math

import jax
import jax.numpy as jnp
from jax.experimental import pallas as pl
from jax.experimental.pallas import tpu as pltpu


_TARGET_CHUNK_BYTES = 4 * 1024 * 1024   # keep each DMA >= ~4 MiB and contiguous
_MAX_INFLIGHT_DMAS = 8                  # cap on outstanding descriptors


def _cdiv(a, b):
    return -(-a // b)


def _make_chunked_copy_kernel(n_chunks, rows_per_chunk, total_rows):
    """Whole-buffer HBM->HBM copy as n_chunks leading-dim DMAs, all in flight."""

    def kernel(x_hbm, o_hbm, sems):
        copies = []
        # Start every descriptor first (multiple outstanding DMAs), then wait.
        for c in range(n_chunks):
            start = c * rows_per_chunk
            size = min(rows_per_chunk, total_rows - start)
            cp = pltpu.make_async_copy(
                x_hbm.at[pl.ds(start, size)],
                o_hbm.at[pl.ds(start, size)],
                sems.at[c],
            )
            cp.start()
            copies.append(cp)
        for cp in copies:
            cp.wait()

    return kernel


def pallas_reshape_copy(x, outer_shape):
    """Reshape that materializes a fresh buffer via a chunked HBM->HBM DMA.

    Only use this when a distinct output buffer is explicitly required; the
    plain `pallas_reshape` below (metadata-only) is strictly faster.
    """
    b = x.shape[0]
    final_shape = (b, *outer_shape)

    # Metadata-only view change on the input so the kernel emits the final
    # shape directly (no post-kernel reshape of the Pallas output).
    x_view = x.reshape(final_shape)

    nbytes = x.size * x.dtype.itemsize
    total_rows = final_shape[0]
    bytes_per_row = max(nbytes // max(total_rows, 1), 1)

    # Large contiguous chunks along the leading (row-major outermost) dim.
    rows_per_chunk = max(1, _TARGET_CHUNK_BYTES // bytes_per_row)
    n_chunks = _cdiv(total_rows, rows_per_chunk)
    if n_chunks > _MAX_INFLIGHT_DMAS:
        n_chunks = _MAX_INFLIGHT_DMAS
        rows_per_chunk = _cdiv(total_rows, n_chunks)
        n_chunks = _cdiv(total_rows, rows_per_chunk)

    kernel = _make_chunked_copy_kernel(n_chunks, rows_per_chunk, total_rows)

    # TODO(synk): on v7x, the chunks could additionally be sharded across the
    # two TensorCores via pl.core_map(pltpu.create_tensorcore_mesh(...)).
    return pl.pallas_call(
        kernel,
        out_shape=jax.ShapeDtypeStruct(final_shape, x.dtype),
        in_specs=[pl.BlockSpec(memory_space=pl.ANY)],
        out_specs=pl.BlockSpec(memory_space=pl.ANY),
        scratch_shapes=[pltpu.SemaphoreType.DMA((n_chunks,))],
        cost_estimate=pl.CostEstimate(
            flops=0, transcendentals=0, bytes_accessed=2 * nbytes),
    )(x_view)


def pallas_reshape(x, outer_shape, *, force_copy=False):
    """Equivalent of Reshape(outer_shape)(x) for a contiguous input x.

    Default: metadata-only reshape (zero HBM traffic, fuses with neighbors).
    force_copy=True: route through the Pallas chunked-DMA copy kernel.
    """
    if force_copy:
        return pallas_reshape_copy(x, outer_shape)
    b = x.shape[0]
    return x.reshape((b, *outer_shape))


if __name__ == "__main__":
    key = jax.random.PRNGKey(0)
    # NCHW-style input, as the PyTorch module would typically receive.
    x = jax.random.normal(key, (2, 4, 16, 16), dtype=jnp.float32)

    outer_shape = (8, 128)  # 4*16*16 = 1024 = 8*128, analogous to torch .view
    ref = x.reshape(x.shape[0], *outer_shape)

    # Default (optimal) path: pure metadata, no kernel.
    y_fast = pallas_reshape(x, outer_shape)
    jax.block_until_ready(y_fast)
    assert y_fast.shape == (2, 8, 128)
    assert y_fast.dtype == x.dtype
    assert bool(jnp.all(y_fast == ref))

    # Fresh-buffer path: exercise the Pallas chunked-DMA copy kernel once.
    y_copy = pallas_reshape(x, outer_shape, force_copy=True)
    jax.block_until_ready(y_copy)
    assert y_copy.shape == (2, 8, 128)
    assert y_copy.dtype == x.dtype
    assert bool(jnp.all(y_copy == ref))

    print("KERNEL_OK")
</pallas_src>

<mosaic_0001>
module attributes {stable_mosaic.version = 11 : i64} {
  func.func @kernel(%arg0: memref<2x8x128xf32, #tpu.memory_space<any>>, %arg1: memref<2x8x128xf32, #tpu.memory_space<any>>, %arg2: memref<1x!tpu.dma_semaphore, #tpu.memory_space<semaphore_mem>>) attributes {dimension_semantics = [], scalar_prefetch = 0 : i64, scratch_operands = 1 : i64, tpu.core_type = #tpu.core_type<tc>} {
    %c0_i32 = arith.constant 0 : i32
    %c0_i32_0 = arith.constant 0 : i32
    %c0_i32_1 = arith.constant 0 : i32
    %c0_i32_2 = arith.constant 0 : i32
    %0 = tpu.memref_slice %arg0[%c0_i32_0, %c0_i32_1, %c0_i32_2] : memref<2x8x128xf32, #tpu.memory_space<any>> -> memref<2x8x128xf32, #tpu.memory_space<any>>
    %c0_i32_3 = arith.constant 0 : i32
    %c0_i32_4 = arith.constant 0 : i32
    %c0_i32_5 = arith.constant 0 : i32
    %1 = tpu.memref_slice %arg1[%c0_i32_3, %c0_i32_4, %c0_i32_5] : memref<2x8x128xf32, #tpu.memory_space<any>> -> memref<2x8x128xf32, #tpu.memory_space<any>>
    %2 = tpu.memref_slice %arg2[%c0_i32] : memref<1x!tpu.dma_semaphore, #tpu.memory_space<semaphore_mem>> -> memref<1x!tpu.dma_semaphore, #tpu.memory_space<semaphore_mem>>
    %3 = tpu.memref_squeeze %2 : memref<1x!tpu.dma_semaphore, #tpu.memory_space<semaphore_mem>> -> memref<!tpu.dma_semaphore, #tpu.memory_space<semaphore_mem>>
    tpu.enqueue_dma source(%0 : memref<2x8x128xf32, #tpu.memory_space<any>>) target(%1 : memref<2x8x128xf32, #tpu.memory_space<any>>) target_semaphore(%3 : memref<!tpu.dma_semaphore, #tpu.memory_space<semaphore_mem>>)
    %c0_i32_6 = arith.constant 0 : i32
    %c0_i32_7 = arith.constant 0 : i32
    %c0_i32_8 = arith.constant 0 : i32
    %c0_i32_9 = arith.constant 0 : i32
    %4 = tpu.memref_slice %arg0[%c0_i32_7, %c0_i32_8, %c0_i32_9] : memref<2x8x128xf32, #tpu.memory_space<any>> -> memref<2x8x128xf32, #tpu.memory_space<any>>
    %c0_i32_10 = arith.constant 0 : i32
    %c0_i32_11 = arith.constant 0 : i32
    %c0_i32_12 = arith.constant 0 : i32
    %5 = tpu.memref_slice %arg1[%c0_i32_10, %c0_i32_11, %c0_i32_12] : memref<2x8x128xf32, #tpu.memory_space<any>> -> memref<2x8x128xf32, #tpu.memory_space<any>>
    %6 = tpu.memref_slice %arg2[%c0_i32_6] : memref<1x!tpu.dma_semaphore, #tpu.memory_space<semaphore_mem>> -> memref<1x!tpu.dma_semaphore, #tpu.memory_space<semaphore_mem>>
    %7 = tpu.memref_squeeze %6 : memref<1x!tpu.dma_semaphore, #tpu.memory_space<semaphore_mem>> -> memref<!tpu.dma_semaphore, #tpu.memory_space<semaphore_mem>>
    tpu.wait_dma2 semaphore(%7 : memref<!tpu.dma_semaphore, #tpu.memory_space<semaphore_mem>>) src(%4 : memref<2x8x128xf32, #tpu.memory_space<any>>) dst(%5 : memref<2x8x128xf32, #tpu.memory_space<any>>)
    return
  }
}

</mosaic_0001>

<llo_original>
// kernel: tpu_custom_call.1
$region0: #{tpu_custom_call.1}
  #allocation0 [shape = 'u32[]', space=smem, size = 0x4, offset = 0x4, fixed_abs, tag = 'smem constant byte address 0x4 - core index']
  #allocation1 [shape = 'u32[144,128]{1,0:T(1,128)}', space=vmem, size = 0x12000, scoped, tag = 'internal scratch']
  #allocation2 [shape = 's32[1]{0}', space=sflag, size = 0x4, scoped, tag = 'scratch operand']
  #allocation3 [shape = 's32[]', space=sflag, size = 0x4, offset = 0, fixed_abs, tag = 'sflag constant byte address 0x0 - dummy sync flag']
  #allocation4 [shape = 'u32[0]{0}', space=smem, size = 0, offset = 0, fixed_abs, tag = 'smem constant byte address 0x0 - null']
  %s0 = inlined_call_operand.hbm [shape: f32[2,8,128], index: 0, kind: input, shape index: {}]
  %s1 = inlined_call_operand.hbm [shape: f32[2,8,128], index: 1, kind: output, shape index: {}]
  %s2 = sld [smem:[#allocation0]]
  $region2: #{tpu_custom_call.1} parent=0
    _
  %s4 = ssub.s32 1, %s2
  %s5 = scalar_select 0, %s4, %s2
  %s7 = sshll.u32 1, 14
  %s8 = sxor.u32 4294967295, %s7
  %s11 = sshll.u32 3, 24
  %s12 = sxor.u32 4294967295, %s11
  %s13 = sand.u32 0, %s12
  %s15 = sor.u32 %s13, 0
  %18 = dma.general %s0, 256, %s1, [#allocation2], [#allocation3], [#allocation4], %s15, 0
  %s19 = smul.u32 2, 8
  %s20 = smul.u32 %s19, 1
  %s21 = sshll.u32 %s20, 4
  %22 = dma.done [#allocation2], %s21
  %23 = vsyncmov [#allocation2]
  %s24 = vpop.sfrf %23
  %p25 = scmp.eq.s32.totalorder %s24, 0
  %p26 = pneg %p25
  %28 = shalt.err (%p26)

</llo_original>
